<compile_context>
chip_gen: v6e
topology: v6e:2x2x1
jax: 0.10.0
libtpu: 0.0.40
codegen_flags: <defaults>
</compile_context>

<pallas_src>
import jax
import jax.numpy as jnp
from jax.experimental import pallas as pl
from jax.experimental.pallas import tpu as pltpu


def action_value_distri_kernel(obs_ref, act_ref,
                               w1o_ref, w1a_ref, b1_ref,
                               w2_ref, b2_ref,
                               w3_ref, b3_ref,
                               out_ref):
    obs = obs_ref[...]
    act = act_ref[...]
    # Hoist bias reads once (cheap insurance if an inner loop is added later).
    b1 = b1_ref[...]
    b2 = b2_ref[...]
    b3 = b3_ref[...]

    # Layer 1: split-weight matmul replaces the lane-axis concat(obs, act).
    h1 = jnp.dot(obs, w1o_ref[...], preferred_element_type=jnp.float32)
    h1 = h1 + jnp.dot(act, w1a_ref[...], preferred_element_type=jnp.float32)
    h1 = jnp.maximum(h1 + b1, 0.0)

    # Layer 2 + ReLU.
    h2 = jnp.dot(h1, w2_ref[...], preferred_element_type=jnp.float32) + b2
    h2 = jnp.maximum(h2, 0.0)

    # Output layer (identity activation), out_features = 2.
    logits = jnp.dot(h2, w3_ref[...], preferred_element_type=jnp.float32) + b3

    # chunk(logits, 2, -1): col 0 -> value_mean, col 1 -> value_std.
    mean = logits[:, 0:1]
    std = logits[:, 1:2]
    # Stable softplus with a single exp + log1p (one EUP pass, no dual branch).
    sp = jnp.maximum(std, 0.0) + jnp.log1p(jnp.exp(-jnp.abs(std)))

    out_ref[...] = jnp.concatenate([mean, sp], axis=-1).astype(out_ref.dtype)


def _default_block_b(B):
    # Scale the batch tile with B: round small batches up to a sublane multiple,
    # cap at 2048 rows (256-aligned for the MXU M dim, ~0.3 MiB double-buffered
    # VMEM) so large batches keep a multi-step "parallel" grid for v7x megacore.
    if B <= 2048:
        return max(8, ((B + 7) // 8) * 8)
    return 2048


def action_value_distri(obs, act, params, *, block_b=None):
    """Pallas-backed forward pass of ActionValueDistri.

    obs: (B, obs_dim) f32, act: (B, act_dim) f32
    params: dict with w1 (obs+act, h1), b1 (1, h1), w2 (h1, h2), b2 (1, h2),
            w3 (h2, 2), b3 (1, 2)
    returns (B, 2) f32: concat([value_mean, softplus(value_std)], -1)
    """
    B, obs_dim = obs.shape
    _, act_dim = act.shape
    w1, b1 = params["w1"], params["b1"]
    w2, b2 = params["w2"], params["b2"]
    w3, b3 = params["w3"], params["b3"]

    # Split the first-layer weight so the kernel never concatenates obs/act.
    w1_obs = w1[:obs_dim, :]
    w1_act = w1[obs_dim:, :]

    if block_b is None:
        block_b = _default_block_b(B)

    # Pad the batch so it tiles evenly; padded rows are sliced off afterwards.
    B_pad = pl.cdiv(B, block_b) * block_b
    if B_pad != B:
        pad = B_pad - B
        obs = jnp.pad(obs, ((0, pad), (0, 0)))
        act = jnp.pad(act, ((0, pad), (0, 0)))

    grid = (B_pad // block_b,)

    def batch_map(i):
        return (i, 0)

    def full_map(i):
        return (0, 0)

    out = pl.pallas_call(
        action_value_distri_kernel,
        out_shape=jax.ShapeDtypeStruct((B_pad, 2), jnp.float32),
        grid_spec=pltpu.PrefetchScalarGridSpec(
            num_scalar_prefetch=0,
            grid=grid,
            in_specs=[
                pl.BlockSpec((block_b, obs_dim), batch_map),   # obs tile
                pl.BlockSpec((block_b, act_dim), batch_map),   # act tile
                pl.BlockSpec(w1_obs.shape, full_map),          # w1 (obs rows)
                pl.BlockSpec(w1_act.shape, full_map),          # w1 (act rows)
                pl.BlockSpec(b1.shape, full_map),              # b1
                pl.BlockSpec(w2.shape, full_map),              # w2
                pl.BlockSpec(b2.shape, full_map),              # b2
                pl.BlockSpec(w3.shape, full_map),              # w3
                pl.BlockSpec(b3.shape, full_map),              # b3
            ],
            out_specs=pl.BlockSpec((block_b, 2), batch_map),
        ),
        compiler_params=pltpu.CompilerParams(
            dimension_semantics=("parallel",),
        ),
    )(obs, act, w1_obs, w1_act, b1, w2, b2, w3, b3)

    return out[:B] if B_pad != B else out


def init_params(key, obs_dim, act_dim, hidden_sizes):
    """Deterministic synthetic init. Weights stored as (in, out)."""
    sizes = [obs_dim + act_dim] + list(hidden_sizes) + [2]
    params = {}
    keys = jax.random.split(key, len(sizes) - 1)
    for j in range(len(sizes) - 1):
        fan_in, fan_out = sizes[j], sizes[j + 1]
        kw, kb = jax.random.split(keys[j])
        scale = 1.0 / jnp.sqrt(jnp.float32(fan_in))
        params[f"w{j+1}"] = jax.random.uniform(
            kw, (fan_in, fan_out), jnp.float32, -scale, scale)
        params[f"b{j+1}"] = jax.random.uniform(
            kb, (1, fan_out), jnp.float32, -scale, scale)
    return params


def reference_forward(obs, act, params):
    x = jnp.concatenate([obs, act], axis=-1)
    h1 = jax.nn.relu(x @ params["w1"] + params["b1"])
    h2 = jax.nn.relu(h1 @ params["w2"] + params["b2"])
    logits = h2 @ params["w3"] + params["b3"]
    mean, std = logits[:, 0:1], logits[:, 1:2]
    return jnp.concatenate([mean, jax.nn.softplus(std)], axis=-1)


if __name__ == "__main__":
    obs_dim, act_dim = 8, 8
    hidden_sizes = (32, 32)

    key = jax.random.PRNGKey(0)
    k_obs, k_act, k_par = jax.random.split(key, 3)
    params = init_params(k_par, obs_dim, act_dim, hidden_sizes)

    # Main check: small batch, single tile.
    batch = 16
    obs = jax.random.normal(k_obs, (batch, obs_dim), jnp.float32)
    act = jax.random.normal(k_act, (batch, act_dim), jnp.float32)

    out = action_value_distri(obs, act, params)
    out = jax.block_until_ready(out)
    ref = reference_forward(obs, act, params)
    assert out.shape == (batch, 2)
    assert jnp.allclose(out, ref, atol=1e-5, rtol=1e-5), "mismatch vs reference"

    # Secondary check: batch not divisible by the tile size (exercises padding)
    # and an explicit multi-step grid (exercises the tiled path).
    batch2 = 13
    obs2 = jax.random.normal(k_obs, (batch2, obs_dim), jnp.float32)
    act2 = jax.random.normal(k_act, (batch2, act_dim), jnp.float32)
    out2 = jax.block_until_ready(action_value_distri(obs2, act2, params))
    ref2 = reference_forward(obs2, act2, params)
    assert out2.shape == (batch2, 2)
    assert jnp.allclose(out2, ref2, atol=1e-5, rtol=1e-5), "mismatch (padded)"

    out3 = jax.block_until_ready(
        action_value_distri(obs, act, params, block_b=8))
    assert jnp.allclose(out3, ref, atol=1e-5, rtol=1e-5), "mismatch (2-step grid)"

    print("KERNEL_OK")
</pallas_src>

<mosaic_0001>
module attributes {stable_mosaic.version = 11 : i64} {
  func.func @action_value_distri_kernel(%arg0: i32, %arg1: memref<16x8xf32, #tpu.memory_space<vmem>>, %arg2: memref<16x8xf32, #tpu.memory_space<vmem>>, %arg3: memref<8x32xf32, #tpu.memory_space<vmem>>, %arg4: memref<8x32xf32, #tpu.memory_space<vmem>>, %arg5: memref<1x32xf32, #tpu.memory_space<vmem>>, %arg6: memref<32x32xf32, #tpu.memory_space<vmem>>, %arg7: memref<1x32xf32, #tpu.memory_space<vmem>>, %arg8: memref<32x2xf32, #tpu.memory_space<vmem>>, %arg9: memref<1x2xf32, #tpu.memory_space<vmem>>, %arg10: memref<16x2xf32, #tpu.memory_space<vmem>>) attributes {dimension_semantics = [#tpu.dimension_semantics<parallel>], iteration_bounds = array<i64: 1>, scalar_prefetch = 0 : i64, scratch_operands = 0 : i64, tpu.core_type = #tpu.core_type<tc>, window_params = [{transform_indices = @transform_0, window_bounds = array<i64: 16, 8>}, {transform_indices = @transform_1, window_bounds = array<i64: 16, 8>}, {pipeline_mode = #tpu.pipeline_mode<synchronous>, transform_indices = @transform_2, window_bounds = array<i64: 8, 32>}, {pipeline_mode = #tpu.pipeline_mode<synchronous>, transform_indices = @transform_3, window_bounds = array<i64: 8, 32>}, {pipeline_mode = #tpu.pipeline_mode<synchronous>, transform_indices = @transform_4, window_bounds = array<i64: 1, 32>}, {pipeline_mode = #tpu.pipeline_mode<synchronous>, transform_indices = @transform_5, window_bounds = array<i64: 32, 32>}, {pipeline_mode = #tpu.pipeline_mode<synchronous>, transform_indices = @transform_6, window_bounds = array<i64: 1, 32>}, {pipeline_mode = #tpu.pipeline_mode<synchronous>, transform_indices = @transform_7, window_bounds = array<i64: 32, 2>}, {pipeline_mode = #tpu.pipeline_mode<synchronous>, transform_indices = @transform_8, window_bounds = array<i64: 1, 2>}, {transform_indices = @transform_9, window_bounds = array<i64: 16, 2>}]} {
    %c0 = arith.constant 0 : index
    %c0_0 = arith.constant 0 : index
    %0 = vector.load %arg1[%c0, %c0_0] : memref<16x8xf32, #tpu.memory_space<vmem>>, vector<16x8xf32>
    %c0_1 = arith.constant 0 : index
    %c0_2 = arith.constant 0 : index
    %1 = vector.load %arg2[%c0_1, %c0_2] : memref<16x8xf32, #tpu.memory_space<vmem>>, vector<16x8xf32>
    %c0_3 = arith.constant 0 : index
    %c0_4 = arith.constant 0 : index
    %2 = vector.load %arg5[%c0_3, %c0_4] : memref<1x32xf32, #tpu.memory_space<vmem>>, vector<1x32xf32>
    %c0_5 = arith.constant 0 : index
    %c0_6 = arith.constant 0 : index
    %3 = vector.load %arg7[%c0_5, %c0_6] : memref<1x32xf32, #tpu.memory_space<vmem>>, vector<1x32xf32>
    %c0_7 = arith.constant 0 : index
    %c0_8 = arith.constant 0 : index
    %4 = vector.load %arg9[%c0_7, %c0_8] : memref<1x2xf32, #tpu.memory_space<vmem>>, vector<1x2xf32>
    %c0_9 = arith.constant 0 : index
    %c0_10 = arith.constant 0 : index
    %5 = vector.load %arg3[%c0_9, %c0_10] : memref<8x32xf32, #tpu.memory_space<vmem>>, vector<8x32xf32>
    %cst = arith.constant dense<0.000000e+00> : vector<16x32xf32>
    %6 = tpu.matmul %0, %5, %cst {dimension_numbers = #tpu.dot_dimension_numbers<[1], [0], [0], [1], [0, 0, 1, 1], [], []>} : vector<16x8xf32>, vector<8x32xf32>, vector<16x32xf32> -> vector<16x32xf32>
    %c0_11 = arith.constant 0 : index
    %c0_12 = arith.constant 0 : index
    %7 = vector.load %arg4[%c0_11, %c0_12] : memref<8x32xf32, #tpu.memory_space<vmem>>, vector<8x32xf32>
    %cst_13 = arith.constant dense<0.000000e+00> : vector<16x32xf32>
    %8 = tpu.matmul %1, %7, %cst_13 {dimension_numbers = #tpu.dot_dimension_numbers<[1], [0], [0], [1], [0, 0, 1, 1], [], []>} : vector<16x8xf32>, vector<8x32xf32>, vector<16x32xf32> -> vector<16x32xf32>
    %9 = arith.addf %6, %8 : vector<16x32xf32>
    %10 = vector.broadcast %2 : vector<1x32xf32> to vector<16x32xf32>
    %11 = arith.addf %9, %10 : vector<16x32xf32>
    %cst_14 = arith.constant 0.000000e+00 : f32
    %12 = vector.broadcast %cst_14 : f32 to vector<16x32xf32>
    %13 = arith.maximumf %11, %12 : vector<16x32xf32>
    %c0_15 = arith.constant 0 : index
    %c0_16 = arith.constant 0 : index
    %14 = vector.load %arg6[%c0_15, %c0_16] : memref<32x32xf32, #tpu.memory_space<vmem>>, vector<32x32xf32>
    %cst_17 = arith.constant dense<0.000000e+00> : vector<16x32xf32>
    %15 = tpu.matmul %13, %14, %cst_17 {dimension_numbers = #tpu.dot_dimension_numbers<[1], [0], [0], [1], [0, 0, 1, 1], [], []>} : vector<16x32xf32>, vector<32x32xf32>, vector<16x32xf32> -> vector<16x32xf32>
    %16 = vector.broadcast %3 : vector<1x32xf32> to vector<16x32xf32>
    %17 = arith.addf %15, %16 : vector<16x32xf32>
    %cst_18 = arith.constant 0.000000e+00 : f32
    %18 = vector.broadcast %cst_18 : f32 to vector<16x32xf32>
    %19 = arith.maximumf %17, %18 : vector<16x32xf32>
    %c0_19 = arith.constant 0 : index
    %c0_20 = arith.constant 0 : index
    %20 = vector.load %arg8[%c0_19, %c0_20] : memref<32x2xf32, #tpu.memory_space<vmem>>, vector<32x2xf32>
    %cst_21 = arith.constant dense<0.000000e+00> : vector<16x2xf32>
    %21 = tpu.matmul %19, %20, %cst_21 {dimension_numbers = #tpu.dot_dimension_numbers<[1], [0], [0], [1], [0, 0, 1, 1], [], []>} : vector<16x32xf32>, vector<32x2xf32>, vector<16x2xf32> -> vector<16x2xf32>
    %22 = vector.broadcast %4 : vector<1x2xf32> to vector<16x2xf32>
    %23 = arith.addf %21, %22 : vector<16x2xf32>
    %24 = vector.extract_strided_slice %23 {offsets = [0, 0], sizes = [16, 1], strides = [1, 1]} : vector<16x2xf32> to vector<16x1xf32>
    %25 = vector.extract_strided_slice %23 {offsets = [0, 1], sizes = [16, 1], strides = [1, 1]} : vector<16x2xf32> to vector<16x1xf32>
    %cst_22 = arith.constant 0.000000e+00 : f32
    %26 = vector.broadcast %cst_22 : f32 to vector<16x1xf32>
    %27 = arith.maximumf %25, %26 : vector<16x1xf32>
    %28 = math.absf %25 : vector<16x1xf32>
    %cst_23 = arith.constant 0.000000e+00 : f32
    %29 = vector.broadcast %cst_23 : f32 to vector<16x1xf32>
    %30 = arith.subf %29, %28 : vector<16x1xf32>
    %31 = math.exp %30 : vector<16x1xf32>
    %32 = math.log1p %31 : vector<16x1xf32>
    %33 = arith.addf %27, %32 : vector<16x1xf32>
    %34 = tpu.concatenate %24, %33 in 1 : vector<16x1xf32>, vector<16x1xf32> -> vector<16x2xf32>
    %c0_24 = arith.constant 0 : index
    %c0_25 = arith.constant 0 : index
    %35 = vector.load %arg10[%c0_24, %c0_25] : memref<16x2xf32, #tpu.memory_space<vmem>>, vector<16x2xf32>
    tpu.vector_store %arg10[%c0_24, %c0_25], %34 {strides = array<i32>} : memref<16x2xf32, #tpu.memory_space<vmem>>, vector<16x2xf32>,
    return
  }
  func.func @transform_0(%arg0: i32) -> (i32, i32) {
    %c0_i32 = arith.constant 0 : i32
    %c0_i32_0 = arith.constant 0 : i32
    return %arg0, %c0_i32 : i32, i32
  }
  func.func @transform_1(%arg0: i32) -> (i32, i32) {
    %c0_i32 = arith.constant 0 : i32
    %c0_i32_0 = arith.constant 0 : i32
    return %arg0, %c0_i32 : i32, i32
  }
  func.func @transform_2(%arg0: i32) -> (i32, i32) {
    %c0_i32 = arith.constant 0 : i32
    %c0_i32_0 = arith.constant 0 : i32
    %c0_i32_1 = arith.constant 0 : i32
    return %c0_i32, %c0_i32_0 : i32, i32
  }
  func.func @transform_3(%arg0: i32) -> (i32, i32) {
    %c0_i32 = arith.constant 0 : i32
    %c0_i32_0 = arith.constant 0 : i32
    %c0_i32_1 = arith.constant 0 : i32
    return %c0_i32, %c0_i32_0 : i32, i32
  }
  func.func @transform_4(%arg0: i32) -> (i32, i32) {
    %c0_i32 = arith.constant 0 : i32
    %c0_i32_0 = arith.constant 0 : i32
    %c0_i32_1 = arith.constant 0 : i32
    return %c0_i32, %c0_i32_0 : i32, i32
  }
  func.func @transform_5(%arg0: i32) -> (i32, i32) {
    %c0_i32 = arith.constant 0 : i32
    %c0_i32_0 = arith.constant 0 : i32
    %c0_i32_1 = arith.constant 0 : i32
    return %c0_i32, %c0_i32_0 : i32, i32
  }
  func.func @transform_6(%arg0: i32) -> (i32, i32) {
    %c0_i32 = arith.constant 0 : i32
    %c0_i32_0 = arith.constant 0 : i32
    %c0_i32_1 = arith.constant 0 : i32
    return %c0_i32, %c0_i32_0 : i32, i32
  }
  func.func @transform_7(%arg0: i32) -> (i32, i32) {
    %c0_i32 = arith.constant 0 : i32
    %c0_i32_0 = arith.constant 0 : i32
    %c0_i32_1 = arith.constant 0 : i32
    return %c0_i32, %c0_i32_0 : i32, i32
  }
  func.func @transform_8(%arg0: i32) -> (i32, i32) {
    %c0_i32 = arith.constant 0 : i32
    %c0_i32_0 = arith.constant 0 : i32
    %c0_i32_1 = arith.constant 0 : i32
    return %c0_i32, %c0_i32_0 : i32, i32
  }
  func.func @transform_9(%arg0: i32) -> (i32, i32) {
    %c0_i32 = arith.constant 0 : i32
    %c0_i32_0 = arith.constant 0 : i32
    return %arg0, %c0_i32 : i32, i32
  }
}

</mosaic_0001>

<llo_original>
// kernel: tpu_custom_call.1
$region0: #{tpu_custom_call.1}
  #allocation0 [shape = 'u32[]', space=smem, size = 0x4, offset = 0x4, fixed_abs, tag = 'smem constant byte address 0x4 - core index']
  #allocation1 [shape = 'u32[144,128]{1,0:T(1,128)}', space=vmem, size = 0x12000, scoped, tag = 'internal scratch']
  %s0 = inlined_call_operand.vmem [shape: f32[16,8], index: 0, kind: input, shape index: {}]
  %s1 = inlined_call_operand.vmem [shape: f32[16,8], index: 1, kind: input, shape index: {}]
  %s2 = inlined_call_operand.vmem [shape: f32[8,32], index: 2, kind: input, shape index: {}]
  %s3 = inlined_call_operand.vmem [shape: f32[8,32], index: 3, kind: input, shape index: {}]
  %s4 = inlined_call_operand.vmem [shape: f32[1,32], index: 4, kind: input, shape index: {}]
  %s5 = inlined_call_operand.vmem [shape: f32[32,32], index: 5, kind: input, shape index: {}]
  %s6 = inlined_call_operand.vmem [shape: f32[1,32], index: 6, kind: input, shape index: {}]
  %s7 = inlined_call_operand.vmem [shape: f32[32,2], index: 7, kind: input, shape index: {}]
  %s8 = inlined_call_operand.vmem [shape: f32[1,2], index: 8, kind: input, shape index: {}]
  %s9 = inlined_call_operand.vmem [shape: f32[16,2], index: 9, kind: output, shape index: {}]
  %s10 = sld [smem:[#allocation0]]
  $region46: #{tpu_custom_call.1} parent=0
    _
  %s12 = ssub.s32 1, %s10
  %s13 = scalar_select 0, %s12, %s10
  // Predicated region
  $region2: #{tpu_custom_call.1} parent=0 // pred_check
    _
  $region3: #{tpu_custom_call.1} parent=0 // pred_check_branch
    %15 = sbr.rel (0) target = $region5
  $region4: #{tpu_custom_call.1} parent=0 // pred_region
    _
  $region5: #{tpu_custom_call.1} parent=0 // pred_fallthru
    _
  // Predicated region
  $region6: #{tpu_custom_call.1} parent=0 // pred_check
    _
  $region7: #{tpu_custom_call.1} parent=0 // pred_check_branch
    %17 = sbr.rel (0) target = $region9
  $region8: #{tpu_custom_call.1} parent=0 // pred_region
    _
  $region9: #{tpu_custom_call.1} parent=0 // pred_fallthru
    _
  // Predicated region
  $region10: #{tpu_custom_call.1} parent=0 // pred_check
    _
  $region11: #{tpu_custom_call.1} parent=0 // pred_check_branch
    %19 = sbr.rel (0) target = $region13
  $region12: #{tpu_custom_call.1} parent=0 // pred_region
    _
  $region13: #{tpu_custom_call.1} parent=0 // pred_fallthru
    _
  // Predicated region
  $region14: #{tpu_custom_call.1} parent=0 // pred_check
    _
  $region15: #{tpu_custom_call.1} parent=0 // pred_check_branch
    %21 = sbr.rel (0) target = $region17
  $region16: #{tpu_custom_call.1} parent=0 // pred_region
    _
  $region17: #{tpu_custom_call.1} parent=0 // pred_fallthru
    _
  // Predicated region
  $region18: #{tpu_custom_call.1} parent=0 // pred_check
    _
  $region19: #{tpu_custom_call.1} parent=0 // pred_check_branch
    %23 = sbr.rel (0) target = $region21
  $region20: #{tpu_custom_call.1} parent=0 // pred_region
    _
  $region21: #{tpu_custom_call.1} parent=0 // pred_fallthru
    _
  // Predicated region
  $region22: #{tpu_custom_call.1} parent=0 // pred_check
    _
  $region23: #{tpu_custom_call.1} parent=0 // pred_check_branch
    %25 = sbr.rel (0) target = $region25
  $region24: #{tpu_custom_call.1} parent=0 // pred_region
    _
  $region25: #{tpu_custom_call.1} parent=0 // pred_fallthru
    _
  // Predicated region
  $region26: #{tpu_custom_call.1} parent=0 // pred_check
    _
  $region27: #{tpu_custom_call.1} parent=0 // pred_check_branch
    %27 = sbr.rel (0) target = $region29
  $region28: #{tpu_custom_call.1} parent=0 // pred_region
    _
  $region29: #{tpu_custom_call.1} parent=0 // pred_fallthru
    _
  // Predicated region
  $region30: #{tpu_custom_call.1} parent=0 // pred_check
    _
  $region31: #{tpu_custom_call.1} parent=0 // pred_check_branch
    %29 = sbr.rel (0) target = $region33
  $region32: #{tpu_custom_call.1} parent=0 // pred_region
    _
  $region33: #{tpu_custom_call.1} parent=0 // pred_fallthru
    _
  // Predicated region
  $region34: #{tpu_custom_call.1} parent=0 // pred_check
    _
  $region35: #{tpu_custom_call.1} parent=0 // pred_check_branch
    %31 = sbr.rel (0) target = $region37
  $region36: #{tpu_custom_call.1} parent=0 // pred_region
    _
  $region37: #{tpu_custom_call.1} parent=0 // pred_fallthru
    _
  %v32 = vld [vmem:[%s0] sm:$0xff]
  %v33 = vld [vmem:[%s0 + $0x8] sm:$0xff]
  %v34 = vld [vmem:[%s1] sm:$0xff]
  %v35 = vld [vmem:[%s1 + $0x8] sm:$0xff]
  %v36 = vld [vmem:[%s4] sm:$0x1]
  %v37 = vld [vmem:[%s6] sm:$0x1]
  %v38 = vld [vmem:[%s8] sm:$0x1]
  %v39 = vld [vmem:[%s2] sm:$0xff]
  %v40 = vld [vmem:[%s3] sm:$0xff]
  %vm41 = vcmask 64512
  %v43 = vsel %vm41, %v34, 0
  %v46 = vsel %vm41, %v35, 0
  %48 = vmatprep.subr.mxu0 0.0
  %49 = vmatpush1.msra.mxu0 0.0
  %50 = vmatprep.subr.mxu0 0.0
  %51 = vmatpush1.msra.mxu0 0.0
  %52 = vmatprep.subr.mxu0 0.0
  %53 = vmatpush1.msra.mxu0 0.0
  %54 = vmatprep.subr.mxu0 0.0
  %55 = vmatpush1.msra.mxu0 0.0
  %56 = vmatprep.subr.mxu0 0.0
  %57 = vmatpush1.msra.mxu0 0.0
  %58 = vmatprep.subr.mxu0 0.0
  %59 = vmatpush1.msra.mxu0 0.0
  %60 = vmatprep.subr.mxu0 0.0
  %61 = vmatpush1.msra.mxu0 0.0
  %62 = vmatprep.subr.mxu0 0.0
  %63 = vmatpush1.msra.mxu0 0.0
  %64 = vmatprep.subr.mxu0 0.0
  %65 = vmatpush1.msra.mxu0 0.0
  %66 = vmatprep.subr.mxu0 0.0
  %67 = vmatpush1.msra.mxu0 0.0
  %68 = vmatprep.subr.mxu0 0.0
  %69 = vmatpush1.msra.mxu0 0.0
  %70 = vmatprep.subr.mxu0 0.0
  %71 = vmatpush1.msra.mxu0 0.0
  %72 = vmatprep.subr.mxu0 0.0
  %73 = vmatpush1.msra.mxu0 0.0
  %74 = vmatprep.subr.mxu0 0.0
  %75 = vmatpush1.msra.mxu0 0.0
  %76 = vmatprep.subr.mxu0 0.0
  %77 = vmatpush1.msra.mxu0 0.0
  %78 = vmatprep.subr.mxu0 0.0
  %79 = vmatpush1.msra.mxu0 %v40
  %80 = vmatprep.subr.mxu0 0.0
  %81 = vmatpush2.msra.mxu0 0.0
  %82 = vmatprep.subr.mxu0 0.0
  %83 = vmatpush2.msra.mxu0 0.0
  %84 = vmatprep.subr.mxu0 0.0
  %85 = vmatpush2.msra.mxu0 0.0
  %86 = vmatprep.subr.mxu0 0.0
  %87 = vmatpush2.msra.mxu0 0.0
  %88 = vmatprep.subr.mxu0 0.0
  %89 = vmatpush2.msra.mxu0 0.0
  %90 = vmatprep.subr.mxu0 0.0
  %91 = vmatpush2.msra.mxu0 0.0
  %92 = vmatprep.subr.mxu0 0.0
  %93 = vmatpush2.msra.mxu0 0.0
  %94 = vmatprep.subr.mxu0 0.0
  %95 = vmatpush2.msra.mxu0 0.0
  %96 = vmatprep.subr.mxu0 0.0
  %97 = vmatpush2.msra.mxu0 0.0
  %98 = vmatprep.subr.mxu0 0.0
  %99 = vmatpush2.msra.mxu0 0.0
  %100 = vmatprep.subr.mxu0 0.0
  %101 = vmatpush2.msra.mxu0 0.0
  %102 = vmatprep.subr.mxu0 0.0
  %103 = vmatpush2.msra.mxu0 0.0
  %104 = vmatprep.subr.mxu0 0.0
  %105 = vmatpush2.msra.mxu0 0.0
  %106 = vmatprep.subr.mxu0 0.0
  %107 = vmatpush2.msra.mxu0 0.0
  %108 = vmatprep.subr.mxu0 0.0
  %109 = vmatpush2.msra.mxu0 0.0
  %110 = vmatprep.subr.mxu0 0.0
  %111 = vmatpush2.msra.mxu0 0.0
  %112 = vmatprep.mubr.f32.mxu0 0.0
  %113 = vmatmul.mubr.f32.gmra.mxu0 %v43
  %v114 = vpop.f32.mrf.mxu0
  %v115 = vadd.f32 0.0, %v114
  %v116 = vpop.f32.mrf.mxu0
  %117 = vmatprep.mubr.f32.mxu0 0.0
  %118 = vmatmul.mubr.f32.gmra.mxu0 %v46
  %v119 = vpop.f32.mrf.mxu0
  %v120 = vadd.f32 0.0, %v119
  %v121 = vpop.f32.mrf.mxu0
  %122 = vdwg.mxu0
  %v124 = vsel %vm41, %v32, 0
  %v127 = vsel %vm41, %v33, 0
  %129 = vmatprep.subr.mxu0 0.0
  %130 = vmatpush1.msra.mxu0 0.0
  %131 = vmatprep.subr.mxu0 0.0
  %132 = vmatpush1.msra.mxu0 0.0
  %133 = vmatprep.subr.mxu0 0.0
  %134 = vmatpush1.msra.mxu0 0.0
  %135 = vmatprep.subr.mxu0 0.0
  %136 = vmatpush1.msra.mxu0 0.0
  %137 = vmatprep.subr.mxu0 0.0
  %138 = vmatpush1.msra.mxu0 0.0
  %139 = vmatprep.subr.mxu0 0.0
  %140 = vmatpush1.msra.mxu0 0.0
  %141 = vmatprep.subr.mxu0 0.0
  %142 = vmatpush1.msra.mxu0 0.0
  %143 = vmatprep.subr.mxu0 0.0
  %144 = vmatpush1.msra.mxu0 0.0
  %145 = vmatprep.subr.mxu0 0.0
  %146 = vmatpush1.msra.mxu0 0.0
  %147 = vmatprep.subr.mxu0 0.0
  %148 = vmatpush1.msra.mxu0 0.0
  %149 = vmatprep.subr.mxu0 0.0
  %150 = vmatpush1.msra.mxu0 0.0
  %151 = vmatprep.subr.mxu0 0.0
  %152 = vmatpush1.msra.mxu0 0.0
  %153 = vmatprep.subr.mxu0 0.0
  %154 = vmatpush1.msra.mxu0 0.0
  %155 = vmatprep.subr.mxu0 0.0
  %156 = vmatpush1.msra.mxu0 0.0
  %157 = vmatprep.subr.mxu0 0.0
  %158 = vmatpush1.msra.mxu0 0.0
  %159 = vmatprep.subr.mxu0 0.0
  %160 = vmatpush1.msra.mxu0 %v39
  %161 = vmatprep.subr.mxu0 0.0
  %162 = vmatpush2.msra.mxu0 0.0
  %163 = vmatprep.subr.mxu0 0.0
  %164 = vmatpush2.msra.mxu0 0.0
  %165 = vmatprep.subr.mxu0 0.0
  %166 = vmatpush2.msra.mxu0 0.0
  %167 = vmatprep.subr.mxu0 0.0
  %168 = vmatpush2.msra.mxu0 0.0
  %169 = vmatprep.subr.mxu0 0.0
  %170 = vmatpush2.msra.mxu0 0.0
  %171 = vmatprep.subr.mxu0 0.0
  %172 = vmatpush2.msra.mxu0 0.0
  %173 = vmatprep.subr.mxu0 0.0
  %174 = vmatpush2.msra.mxu0 0.0
  %175 = vmatprep.subr.mxu0 0.0
  %176 = vmatpush2.msra.mxu0 0.0
  %177 = vmatprep.subr.mxu0 0.0
  %178 = vmatpush2.msra.mxu0 0.0
  %179 = vmatprep.subr.mxu0 0.0
  %180 = vmatpush2.msra.mxu0 0.0
  %181 = vmatprep.subr.mxu0 0.0
  %182 = vmatpush2.msra.mxu0 0.0
  %183 = vmatprep.subr.mxu0 0.0
  %184 = vmatpush2.msra.mxu0 0.0
  %185 = vmatprep.subr.mxu0 0.0
  %186 = vmatpush2.msra.mxu0 0.0
  %187 = vmatprep.subr.mxu0 0.0
  %188 = vmatpush2.msra.mxu0 0.0
  %189 = vmatprep.subr.mxu0 0.0
  %190 = vmatpush2.msra.mxu0 0.0
  %191 = vmatprep.subr.mxu0 0.0
  %192 = vmatpush2.msra.mxu0 0.0
  %193 = vmatprep.mubr.f32.mxu0 0.0
  %194 = vmatmul.mubr.f32.gmra.mxu0 %v124
  %v195 = vpop.f32.mrf.mxu0
  %v196 = vadd.f32 %v115, %v195
  %v197 = vpop.f32.mrf.mxu0
  %198 = vmatprep.mubr.f32.mxu0 0.0
  %199 = vmatmul.mubr.f32.gmra.mxu0 %v127
  %v200 = vpop.f32.mrf.mxu0
  %v201 = vadd.f32 %v120, %v200
  %v202 = vpop.f32.mrf.mxu0
  %203 = vdwg.mxu0
  %v205 = vlaneseq
  %v206 = vshrl.u32 %v205, 7
  %v207 = vsub.s32 0, %v206
  %v208 = vrot.slane %v36, %v207
  %v210 = vadd.f32 %v196, %v208
  %v211 = vadd.f32 %v201, %v208
  %v212 = vmax.f32 %v210, 0.0
  %v213 = vmax.f32 %v211, 0.0
  %v214 = vld [vmem:[%s5] sm:$0xff]
  %v215 = vld [vmem:[%s5 + $0x8] sm:$0xff]
  %v216 = vld [vmem:[%s5 + $0x10] sm:$0xff]
  %v217 = vld [vmem:[%s5 + $0x18] sm:$0xff]
  %v219 = vlaneseq
  %v220 = vshrl.u32 %v219, 7
  %v221 = vsub.s32 0, %v220
  %v222 = vrot.slane %v37, %v221
  %vm224 = vcmask 261120
  %v226 = vsel %vm224, %v212, 0
  %v229 = vsel %vm224, %v213, 0
  %231 = vmatprep.subr.mxu0 0.0
  %232 = vmatpush1.msra.mxu0 0.0
  %233 = vmatprep.subr.mxu0 0.0
  %234 = vmatpush1.msra.mxu0 0.0
  %235 = vmatprep.subr.mxu0 0.0
  %236 = vmatpush1.msra.mxu0 0.0
  %237 = vmatprep.subr.mxu0 0.0
  %238 = vmatpush1.msra.mxu0 0.0
  %239 = vmatprep.subr.mxu0 0.0
  %240 = vmatpush1.msra.mxu0 0.0
  %241 = vmatprep.subr.mxu0 0.0
  %242 = vmatpush1.msra.mxu0 0.0
  %243 = vmatprep.subr.mxu0 0.0
  %244 = vmatpush1.msra.mxu0 0.0
  %245 = vmatprep.subr.mxu0 0.0
  %246 = vmatpush1.msra.mxu0 0.0
  %247 = vmatprep.subr.mxu0 0.0
  %248 = vmatpush1.msra.mxu0 0.0
  %249 = vmatprep.subr.mxu0 0.0
  %250 = vmatpush1.msra.mxu0 0.0
  %251 = vmatprep.subr.mxu0 0.0
  %252 = vmatpush1.msra.mxu0 0.0
  %253 = vmatprep.subr.mxu0 0.0
  %254 = vmatpush1.msra.mxu0 0.0
  %255 = vmatprep.subr.mxu0 0.0
  %256 = vmatpush1.msra.mxu0 %v217
  %257 = vmatprep.subr.mxu0 0.0
  %258 = vmatpush1.msra.mxu0 %v216
  %259 = vmatprep.subr.mxu0 0.0
  %260 = vmatpush1.msra.mxu0 %v215
  %261 = vmatprep.subr.mxu0 0.0
  %262 = vmatpush1.msra.mxu0 %v214
  %263 = vmatprep.subr.mxu0 0.0
  %264 = vmatpush2.msra.mxu0 0.0
  %265 = vmatprep.subr.mxu0 0.0
  %266 = vmatpush2.msra.mxu0 0.0
  %267 = vmatprep.subr.mxu0 0.0
  %268 = vmatpush2.msra.mxu0 0.0
  %269 = vmatprep.subr.mxu0 0.0
  %270 = vmatpush2.msra.mxu0 0.0
  %271 = vmatprep.subr.mxu0 0.0
  %272 = vmatpush2.msra.mxu0 0.0
  %273 = vmatprep.subr.mxu0 0.0
  %274 = vmatpush2.msra.mxu0 0.0
  %275 = vmatprep.subr.mxu0 0.0
  %276 = vmatpush2.msra.mxu0 0.0
  %277 = vmatprep.subr.mxu0 0.0
  %278 = vmatpush2.msra.mxu0 0.0
  %279 = vmatprep.subr.mxu0 0.0
  %280 = vmatpush2.msra.mxu0 0.0
  %281 = vmatprep.subr.mxu0 0.0
  %282 = vmatpush2.msra.mxu0 0.0
  %283 = vmatprep.subr.mxu0 0.0
  %284 = vmatpush2.msra.mxu0 0.0
  %285 = vmatprep.subr.mxu0 0.0
  %286 = vmatpush2.msra.mxu0 0.0
  %287 = vmatprep.subr.mxu0 0.0
  %288 = vmatpush2.msra.mxu0 0.0
  %289 = vmatprep.subr.mxu0 0.0
  %290 = vmatpush2.msra.mxu0 0.0
  %291 = vmatprep.subr.mxu0 0.0
  %292 = vmatpush2.msra.mxu0 0.0
  %293 = vmatprep.subr.mxu0 0.0
  %294 = vmatpush2.msra.mxu0 0.0
  %295 = vmatprep.mubr.f32.mxu0 0.0
  %296 = vmatmul.mubr.f32.gmra.mxu0 %v226
  %v297 = vpop.f32.mrf.mxu0
  %v298 = vadd.f32 %v222, %v297
  %v299 = vpop.f32.mrf.mxu0
  %300 = vmatprep.mubr.f32.mxu0 0.0
  %301 = vmatmul.mubr.f32.gmra.mxu0 %v229
  %v302 = vpop.f32.mrf.mxu0
  %v303 = vadd.f32 %v222, %v302
  %v304 = vpop.f32.mrf.mxu0
  %305 = vdwg.mxu0
  %v306 = vmax.f32 %v298, 0.0
  %v307 = vmax.f32 %v303, 0.0
  %v308 = vld [vmem:[%s7] sm:$0xff]
  %v309 = vld [vmem:[%s7 + $0x8] sm:$0xff]
  %v310 = vld [vmem:[%s7 + $0x10] sm:$0xff]
  %v311 = vld [vmem:[%s7 + $0x18] sm:$0xff]
  %v313 = vlaneseq
  %v314 = vshrl.u32 %v313, 7
  %v315 = vsub.s32 0, %v314
  %v316 = vrot.slane %v38, %v315
  %v319 = vsel %vm224, %v306, 0
  %v322 = vsel %vm224, %v307, 0
  %324 = vmatprep.subr.mxu0 0.0
  %325 = vmatpush1.msra.mxu0 0.0
  %326 = vmatprep.subr.mxu0 0.0
  %327 = vmatpush1.msra.mxu0 0.0
  %328 = vmatprep.subr.mxu0 0.0
  %329 = vmatpush1.msra.mxu0 0.0
  %330 = vmatprep.subr.mxu0 0.0
  %331 = vmatpush1.msra.mxu0 0.0
  %332 = vmatprep.subr.mxu0 0.0
  %333 = vmatpush1.msra.mxu0 0.0
  %334 = vmatprep.subr.mxu0 0.0
  %335 = vmatpush1.msra.mxu0 0.0
  %336 = vmatprep.subr.mxu0 0.0
  %337 = vmatpush1.msra.mxu0 0.0
  %338 = vmatprep.subr.mxu0 0.0
  %339 = vmatpush1.msra.mxu0 0.0
  %340 = vmatprep.subr.mxu0 0.0
  %341 = vmatpush1.msra.mxu0 0.0
  %342 = vmatprep.subr.mxu0 0.0
  %343 = vmatpush1.msra.mxu0 0.0
  %344 = vmatprep.subr.mxu0 0.0
  %345 = vmatpush1.msra.mxu0 0.0
  %346 = vmatprep.subr.mxu0 0.0
  %347 = vmatpush1.msra.mxu0 0.0
  %348 = vmatprep.subr.mxu0 0.0
  %349 = vmatpush1.msra.mxu0 %v311
  %350 = vmatprep.subr.mxu0 0.0
  %351 = vmatpush1.msra.mxu0 %v310
  %352 = vmatprep.subr.mxu0 0.0
  %353 = vmatpush1.msra.mxu0 %v309
  %354 = vmatprep.subr.mxu0 0.0
  %355 = vmatpush1.msra.mxu0 %v308
  %356 = vmatprep.subr.mxu0 0.0
  %357 = vmatpush2.msra.mxu0 0.0
  %358 = vmatprep.subr.mxu0 0.0
  %359 = vmatpush2.msra.mxu0 0.0
  %360 = vmatprep.subr.mxu0 0.0
  %361 = vmatpush2.msra.mxu0 0.0
  %362 = vmatprep.subr.mxu0 0.0
  %363 = vmatpush2.msra.mxu0 0.0
  %364 = vmatprep.subr.mxu0 0.0
  %365 = vmatpush2.msra.mxu0 0.0
  %366 = vmatprep.subr.mxu0 0.0
  %367 = vmatpush2.msra.mxu0 0.0
  %368 = vmatprep.subr.mxu0 0.0
  %369 = vmatpush2.msra.mxu0 0.0
  %370 = vmatprep.subr.mxu0 0.0
  %371 = vmatpush2.msra.mxu0 0.0
  %372 = vmatprep.subr.mxu0 0.0
  %373 = vmatpush2.msra.mxu0 0.0
  %374 = vmatprep.subr.mxu0 0.0
  %375 = vmatpush2.msra.mxu0 0.0
  %376 = vmatprep.subr.mxu0 0.0
  %377 = vmatpush2.msra.mxu0 0.0
  %378 = vmatprep.subr.mxu0 0.0
  %379 = vmatpush2.msra.mxu0 0.0
  %380 = vmatprep.subr.mxu0 0.0
  %381 = vmatpush2.msra.mxu0 0.0
  %382 = vmatprep.subr.mxu0 0.0
  %383 = vmatpush2.msra.mxu0 0.0
  %384 = vmatprep.subr.mxu0 0.0
  %385 = vmatpush2.msra.mxu0 0.0
  %386 = vmatprep.subr.mxu0 0.0
  %387 = vmatpush2.msra.mxu0 0.0
  %388 = vmatprep.mubr.f32.mxu0 0.0
  %389 = vmatmul.mubr.f32.gmra.mxu0 %v319
  %v390 = vpop.f32.mrf.mxu0
  %v391 = vadd.f32 %v316, %v390
  %v392 = vpop.f32.mrf.mxu0
  %393 = vmatprep.mubr.f32.mxu0 0.0
  %394 = vmatmul.mubr.f32.gmra.mxu0 %v322
  %v395 = vpop.f32.mrf.mxu0
  %v396 = vadd.f32 %v316, %v395
  %v397 = vpop.f32.mrf.mxu0
  %398 = vdwg.mxu0
  %v399 = vmax.f32 %v391, 0.0
  %v400 = vmax.f32 %v396, 0.0
  %v401 = vand.u32 2147483647, %v391
  %v402 = vand.u32 2147483647, %v396
  %v403 = vsub.f32 0.0, %v401
  %v404 = vsub.f32 0.0, %v402
  %v405 = vmul.f32 %v403, 1.442695
  %v406 = vpow.pop %v405
  %v407 = vmul.f32 %v404, 1.442695
  %v408 = vpow.pop %v407
  %v409 = vadd.f32 %v406, 1.0
  %v410 = vlog2.pop %v409
  %v411 = vmul.f32 %v410, 0.6931472
  %v412 = vmul.f32 -0.5, %v406
  %v413 = vadd.f32 %v412, 1.0
  %v414 = vmul.f32 %v413, %v406
  %v415 = vand.u32 2147483647, %v406
  %vm416 = vcmp.lt.f32.partialorder %v415, 0.0004427343
  %v417 = vsel %vm416, %v414, %v411
  %v418 = vadd.f32 %v408, 1.0
  %v419 = vlog2.pop %v418
  %v420 = vmul.f32 %v419, 0.6931472
  %v421 = vmul.f32 -0.5, %v408
  %v422 = vadd.f32 %v421, 1.0
  %v423 = vmul.f32 %v422, %v408
  %v424 = vand.u32 2147483647, %v408
  %vm425 = vcmp.lt.f32.partialorder %v424, 0.0004427343
  %v426 = vsel %vm425, %v423, %v420
  %v427 = vadd.f32 %v399, %v417
  %v428 = vadd.f32 %v400, %v426
  %vm429 = vcmask 7168
  %v430 = vsel %vm429, %v391, %v427
  %v431 = vsel %vm429, %v396, %v428
  %vm432 = vcmask 15360
  %433 = vst.msk [vmem:[%s9] sm:$0xff] %vm432, %v430
  %434 = vst.msk [vmem:[%s9 + $0x8] sm:$0xff] %vm432, %v431
  // Predicated region
  $region38: #{tpu_custom_call.1} parent=0 // pred_check
    _
  $region39: #{tpu_custom_call.1} parent=0 // pred_check_branch
    %436 = sbr.rel (0) target = $region41
  $region40: #{tpu_custom_call.1} parent=0 // pred_region
    _
  $region41: #{tpu_custom_call.1} parent=0 // pred_fallthru
    _
  // Predicated region
  $region42: #{tpu_custom_call.1} parent=0 // pred_check
    _
  $region43: #{tpu_custom_call.1} parent=0 // pred_check_branch
    %438 = sbr.rel (0) target = $region45
  $region44: #{tpu_custom_call.1} parent=0 // pred_region
    _
  $region45: #{tpu_custom_call.1} parent=0 // pred_fallthru
    _

</llo_original>
